<compile_context>
chip_gen: v7x
topology: tpu7x:2x2x1
jax: 0.10.0
libtpu: 0.0.40
codegen_flags: <defaults>
</compile_context>

<pallas_src>
import jax
import jax.numpy as jnp
from jax.experimental import pallas as pl
from jax.experimental.pallas import tpu as pltpu


# ---------------------------------------------------------------------------
# Kernel 1: adaLN modulation (run once).
#   c     = mean(cond, 0) + t                  (B, H)   f32 math
#   s     = SiLU(c)
#   shift = s @ w_shift + b_shift              (B, H)   f32 accumulate
#   scale = s @ w_scale + b_scale              (B, H)
# ---------------------------------------------------------------------------
def _adaln_kernel(t_ref, cond_ref, w_shift_ref, b_shift_ref,
                  w_scale_ref, b_scale_ref, shift_ref, scale_ref):
    c = jnp.mean(cond_ref[...].astype(jnp.float32), axis=0)
    c = c + t_ref[...].astype(jnp.float32)
    s = c * jax.nn.sigmoid(c)                       # SiLU, f32 (EUP + VPU)
    s = s.astype(w_shift_ref.dtype)                 # bf16 MXU path if weights bf16
    shift = jnp.dot(s, w_shift_ref[...], preferred_element_type=jnp.float32)
    scale = jnp.dot(s, w_scale_ref[...], preferred_element_type=jnp.float32)
    shift_ref[...] = (shift + b_shift_ref[...].astype(jnp.float32)).astype(shift_ref.dtype)
    scale_ref[...] = (scale + b_scale_ref[...].astype(jnp.float32)).astype(scale_ref.dtype)


# ---------------------------------------------------------------------------
# Kernel 2: per-T modulate + final linear (gridded over T, auto-pipelined).
#   y      = x[t] * scale + shift              (B, H)   f32 math
#   out[t] = y @ w_lin + b_lin                 (B, O)   f32 accumulate
# ---------------------------------------------------------------------------
def _mod_linear_kernel(x_ref, shift_ref, scale_ref, w_ref, b_ref, out_ref):
    y = x_ref[0].astype(jnp.float32) * scale_ref[...] + shift_ref[...]
    y = y.astype(w_ref.dtype)                       # bf16 MXU path if weights bf16
    out = jnp.dot(y, w_ref[...], preferred_element_type=jnp.float32)
    out = out + b_ref[...].astype(jnp.float32)
    out_ref[0] = out.astype(out_ref.dtype)


def final_layer(x, t, cond, w_ada, b_ada, w_lin, b_lin):
    """x: (T, B, H), t: (B, H), cond: (N, B, H)
       w_ada: (H, 2H), b_ada: (1, 2H)   (PyTorch weights pre-transposed to (in, out))
       w_lin: (H, O),  b_lin: (1, O)
       returns (B, T, O) in x.dtype."""
    T, B, H = x.shape
    N = cond.shape[0]
    O = w_lin.shape[1]
    itemsize = jnp.dtype(x.dtype).itemsize

    # Split adaLN params once in the wrapper (kills the lane-offset-H slice
    # mod[:, :H] / mod[:, H:] inside the kernel).
    w_shift, w_scale = w_ada[:, :H], w_ada[:, H:]
    b_shift, b_scale = b_ada[:, :H], b_ada[:, H:]

    full = pl.BlockSpec(memory_space=pltpu.MemorySpace.VMEM)

    # ---- stage 1: shift/scale, computed once (hoisted out of the T loop) ----
    adaln_cost = pl.CostEstimate(
        flops=2 * 2 * B * H * H + 6 * B * H + N * B * H,
        transcendentals=B * H,
        bytes_accessed=itemsize * (N * B * H + B * H + 2 * H * H + 2 * H)
                       + 4 * 2 * B * H)
    shift, scale = pl.pallas_call(
        _adaln_kernel,
        out_shape=(jax.ShapeDtypeStruct((B, H), jnp.float32),
                   jax.ShapeDtypeStruct((B, H), jnp.float32)),
        in_specs=[full] * 6,
        out_specs=(full, full),
        cost_estimate=adaln_cost,
    )(t, cond, w_shift, b_shift, w_scale, b_scale)

    # ---- stage 2: modulate + linear, gridded over T (double-buffered DMA) ---
    lin_cost = pl.CostEstimate(
        flops=2 * T * B * H * O + 2 * T * B * H,
        transcendentals=0,
        bytes_accessed=itemsize * (T * B * H + H * O + O + T * B * O)
                       + 4 * 2 * B * H)
    out_tbo = pl.pallas_call(
        _mod_linear_kernel,
        out_shape=jax.ShapeDtypeStruct((T, B, O), x.dtype),
        grid=(T,),
        in_specs=[
            pl.BlockSpec((1, B, H), lambda i: (i, 0, 0)),   # x tile, pipelined
            pl.BlockSpec((B, H), lambda i: (0, 0)),         # shift, resident
            pl.BlockSpec((B, H), lambda i: (0, 0)),         # scale, resident
            pl.BlockSpec((H, O), lambda i: (0, 0)),         # w_lin, resident
            pl.BlockSpec((1, O), lambda i: (0, 0)),         # b_lin, resident
        ],
        out_specs=pl.BlockSpec((1, B, O), lambda i: (i, 0, 0)),
        compiler_params=pltpu.CompilerParams(
            dimension_semantics=("parallel",)),
        cost_estimate=lin_cost,
    )(x, shift, scale, w_lin, b_lin)

    # (T, B, O) -> (B, T, O): cheap wrapper-side layout plumbing on the small
    # output; replaces the in-kernel 3-D transpose of the previous version.
    return jnp.transpose(out_tbo, (1, 0, 2))


def _reference(x, t, cond, w_ada, b_ada, w_lin, b_lin):
    H = t.shape[-1]
    c = jnp.mean(cond, axis=0) + t
    silu = c * jax.nn.sigmoid(c)
    mod = silu @ w_ada + b_ada
    shift, scale = mod[:, :H], mod[:, H:]
    y = x * scale[None] + shift[None]
    out = jnp.einsum('tbh,ho->tbo', y, w_lin) + b_lin
    return jnp.transpose(out, (1, 0, 2))


if __name__ == "__main__":
    hidden, out_size = 32, 8
    T, B, N = 8, 2, 4

    key = jax.random.PRNGKey(0)
    kx, kt, kc, kwa, kba, kwl, kbl = jax.random.split(key, 7)

    x = jax.random.normal(kx, (T, B, hidden), jnp.float32)
    t = jax.random.normal(kt, (B, hidden), jnp.float32)
    cond = jax.random.normal(kc, (N, B, hidden), jnp.float32)

    # Parameters (deterministic synthetic init; PyTorch shapes transposed to (in, out)).
    w_ada = 0.05 * jax.random.normal(kwa, (hidden, 2 * hidden), jnp.float32)
    b_ada = 0.05 * jax.random.normal(kba, (1, 2 * hidden), jnp.float32)
    w_lin = 0.05 * jax.random.normal(kwl, (hidden, out_size), jnp.float32)
    b_lin = 0.05 * jax.random.normal(kbl, (1, out_size), jnp.float32)

    # f32 path: exact against the reference.
    out = jax.block_until_ready(
        final_layer(x, t, cond, w_ada, b_ada, w_lin, b_lin))
    ref = _reference(x, t, cond, w_ada, b_ada, w_lin, b_lin)
    assert out.shape == (B, T, out_size)
    assert jnp.allclose(out, ref, atol=1e-5, rtol=1e-5)

    # bf16 operands: halves HBM traffic of x; f32 accumulation inside kernels.
    bf = jnp.bfloat16
    out_bf16 = jax.block_until_ready(final_layer(
        x.astype(bf), t.astype(bf), cond.astype(bf),
        w_ada.astype(bf), b_ada.astype(bf), w_lin.astype(bf), b_lin.astype(bf)))
    assert out_bf16.shape == (B, T, out_size)
    assert jnp.allclose(out_bf16.astype(jnp.float32), ref, atol=5e-2, rtol=5e-2)

    print("KERNEL_OK")
</pallas_src>

<mosaic_0001>
module attributes {stable_mosaic.version = 11 : i64} {
  func.func @_adaln_kernel(%arg0: memref<2x32xf32, #tpu.memory_space<vmem>>, %arg1: memref<4x2x32xf32, #tpu.memory_space<vmem>>, %arg2: memref<32x32xf32, #tpu.memory_space<vmem>>, %arg3: memref<1x32xf32, #tpu.memory_space<vmem>>, %arg4: memref<32x32xf32, #tpu.memory_space<vmem>>, %arg5: memref<1x32xf32, #tpu.memory_space<vmem>>, %arg6: memref<2x32xf32, #tpu.memory_space<vmem>>, %arg7: memref<2x32xf32, #tpu.memory_space<vmem>>) attributes {dimension_semantics = [], scalar_prefetch = 0 : i64, scratch_operands = 0 : i64, tpu.core_type = #tpu.core_type<tc>} {
    %c0 = arith.constant 0 : index
    %c0_0 = arith.constant 0 : index
    %c0_1 = arith.constant 0 : index
    %0 = vector.load %arg1[%c0, %c0_0, %c0_1] : memref<4x2x32xf32, #tpu.memory_space<vmem>>, vector<4x2x32xf32>
    %cst = arith.constant dense<0.000000e+00> : vector<2x32xf32>
    %1 = vector.multi_reduction <add>, %0, %cst [0] : vector<4x2x32xf32> to vector<2x32xf32>
    %cst_2 = arith.constant 4.000000e+00 : f32
    %2 = vector.broadcast %cst_2 : f32 to vector<2x32xf32>
    %3 = arith.divf %1, %2 : vector<2x32xf32>
    %c0_3 = arith.constant 0 : index
    %c0_4 = arith.constant 0 : index
    %4 = vector.load %arg0[%c0_3, %c0_4] : memref<2x32xf32, #tpu.memory_space<vmem>>, vector<2x32xf32>
    %5 = arith.addf %3, %4 : vector<2x32xf32>
    %6 = arith.negf %5 : vector<2x32xf32>
    %7 = math.exp %6 : vector<2x32xf32>
    %cst_5 = arith.constant 1.000000e+00 : f32
    %8 = vector.broadcast %cst_5 : f32 to vector<2x32xf32>
    %9 = arith.addf %8, %7 : vector<2x32xf32>
    %10 = arith.divf %8, %9 : vector<2x32xf32>
    %11 = arith.mulf %5, %10 : vector<2x32xf32>
    %c0_6 = arith.constant 0 : index
    %c0_7 = arith.constant 0 : index
    %12 = vector.load %arg2[%c0_6, %c0_7] : memref<32x32xf32, #tpu.memory_space<vmem>>, vector<32x32xf32>
    %cst_8 = arith.constant dense<0.000000e+00> : vector<2x32xf32>
    %13 = tpu.matmul %11, %12, %cst_8 {dimension_numbers = #tpu.dot_dimension_numbers<[1], [0], [0], [1], [0, 0, 1, 1], [], []>} : vector<2x32xf32>, vector<32x32xf32>, vector<2x32xf32> -> vector<2x32xf32>
    %c0_9 = arith.constant 0 : index
    %c0_10 = arith.constant 0 : index
    %14 = vector.load %arg4[%c0_9, %c0_10] : memref<32x32xf32, #tpu.memory_space<vmem>>, vector<32x32xf32>
    %cst_11 = arith.constant dense<0.000000e+00> : vector<2x32xf32>
    %15 = tpu.matmul %11, %14, %cst_11 {dimension_numbers = #tpu.dot_dimension_numbers<[1], [0], [0], [1], [0, 0, 1, 1], [], []>} : vector<2x32xf32>, vector<32x32xf32>, vector<2x32xf32> -> vector<2x32xf32>
    %c0_12 = arith.constant 0 : index
    %c0_13 = arith.constant 0 : index
    %16 = vector.load %arg3[%c0_12, %c0_13] : memref<1x32xf32, #tpu.memory_space<vmem>>, vector<1x32xf32>
    %17 = vector.broadcast %16 : vector<1x32xf32> to vector<2x32xf32>
    %18 = arith.addf %13, %17 : vector<2x32xf32>
    %c0_14 = arith.constant 0 : index
    %c0_15 = arith.constant 0 : index
    %19 = vector.load %arg6[%c0_14, %c0_15] : memref<2x32xf32, #tpu.memory_space<vmem>>, vector<2x32xf32>
    tpu.vector_store %arg6[%c0_14, %c0_15], %18 {strides = array<i32>} : memref<2x32xf32, #tpu.memory_space<vmem>>, vector<2x32xf32>,
    %c0_16 = arith.constant 0 : index
    %c0_17 = arith.constant 0 : index
    %20 = vector.load %arg5[%c0_16, %c0_17] : memref<1x32xf32, #tpu.memory_space<vmem>>, vector<1x32xf32>
    %21 = vector.broadcast %20 : vector<1x32xf32> to vector<2x32xf32>
    %22 = arith.addf %15, %21 : vector<2x32xf32>
    %c0_18 = arith.constant 0 : index
    %c0_19 = arith.constant 0 : index
    %23 = vector.load %arg7[%c0_18, %c0_19] : memref<2x32xf32, #tpu.memory_space<vmem>>, vector<2x32xf32>
    tpu.vector_store %arg7[%c0_18, %c0_19], %22 {strides = array<i32>} : memref<2x32xf32, #tpu.memory_space<vmem>>, vector<2x32xf32>,
    return
  }
}

</mosaic_0001>

<llo_original>
// kernel: tpu_custom_call.1
$region0: #{tpu_custom_call.1}
  #allocation0 [shape = 'u32[]', space=smem, size = 0x4, offset = 0x4, fixed_abs, tag = 'smem constant byte address 0x4 - core index']
  #allocation1 [shape = 'u32[144,128]{1,0:T(1,128)}', space=vmem, size = 0x12000, scoped, tag = 'internal scratch']
  %s0 = inlined_call_operand.hbm [shape: f32[2,32], index: 0, kind: input, shape index: {}]
  %s1 = inlined_call_operand.hbm [shape: f32[4,2,32], index: 1, kind: input, shape index: {}]
  %s2 = inlined_call_operand.hbm [shape: f32[32,32], index: 2, kind: input, shape index: {}]
  %s3 = inlined_call_operand.vmem [shape: f32[1,32], index: 3, kind: input, shape index: {}]
  %s4 = inlined_call_operand.hbm [shape: f32[32,32], index: 4, kind: input, shape index: {}]
  %s5 = inlined_call_operand.vmem [shape: f32[1,32], index: 5, kind: input, shape index: {}]
  %s6 = inlined_call_operand.hbm [shape: f32[2,32], index: 6, kind: output, shape index: {0}]
  %s7 = inlined_call_operand.hbm [shape: f32[2,32], index: 7, kind: output, shape index: {1}]
  %8 = xla_tuple %s6, %s7
  %s9 = sld [smem:[#allocation0]]
  $region58: #{tpu_custom_call.1} parent=0
    _
  %s11 = ssub.s32 1, %s9
  %s12 = scalar_select 0, %s11, %s9
  $region1: #{tpu_custom_call.1} parent=0
    #allocation2 [shape = 'u8[1024]{0}', space=vmem, size = 0x400, scoped, tag = 'input window, operand 0, single buffered']
    #allocation3 [shape = 's32[1]{0}', space=sflag, size = 0x4, scoped, tag = 'scoped memory for tpu_custom_call.1']
    #allocation4 [shape = 's32[1]{0}', space=sflag, size = 0x4, scoped, tag = 'scoped memory for tpu_custom_call.1']
    #allocation5 [shape = 'u8[4096]{0}', space=vmem, size = 0x1000, scoped, tag = 'input window, operand 1, single buffered']
    #allocation6 [shape = 's32[1]{0}', space=sflag, size = 0x4, scoped, tag = 'scoped memory for tpu_custom_call.1']
    #allocation7 [shape = 'u8[16384]{0}', space=vmem, size = 0x4000, scoped, tag = 'input window, operand 2, single buffered']
    #allocation8 [shape = 'u8[16384]{0}', space=vmem, size = 0x4000, scoped, tag = 'input window, operand 4, single buffered']
    #allocation9 [shape = 's32[1]{0}', space=sflag, size = 0x4, scoped, tag = 'scoped memory for tpu_custom_call.1']
    #allocation10 [shape = 'u8[1024]{0}', space=vmem, size = 0x400, scoped, tag = 'output window, operand 0, single buffered']
    #allocation11 [shape = 'u8[1024]{0}', space=vmem, size = 0x400, scoped, tag = 'output window, operand 1, single buffered']
    #allocation12 [shape = 's32[1]{0}', space=sflag, size = 0x4, scoped, tag = 'scoped memory for tpu_custom_call.1']
    %13 = vsyncpa [#allocation3], 0
    %14 = vsyncpa [#allocation6], 0
    %15 = vsyncpa [#allocation9], 0
    %16 = vsyncpa [#allocation4], 0
    %17 = vsyncpa [#allocation12], 0
    // Predicated region
    $region2: #{tpu_custom_call.1} parent=1 // pred_check
      _
    $region3: #{tpu_custom_call.1} parent=1 // pred_check_branch
      %19 = sbr.rel (0) target = $region5
    $region4: #{tpu_custom_call.1} parent=1 // pred_region
      %s21 = ssub.s32 32, 32
      %22 = vsyncadd [#allocation3], %s21
      %s24 = sshll.u32 [#allocation2], 4
      %s25 = int_to_ptr.vmem [resolvable:$true] %s24
      %27 = dma.hbm_to_vmem [thread:$0]  %s0, 32, %s25, [#allocation3]
    $region5: #{tpu_custom_call.1} parent=1 // pred_fallthru
      _
    // Predicated region
    $region6: #{tpu_custom_call.1} parent=1 // pred_check
      _
    $region7: #{tpu_custom_call.1} parent=1 // pred_check_branch
      %29 = sbr.rel (0) target = $region9
    $region8: #{tpu_custom_call.1} parent=1 // pred_region
      %s31 = ssub.s32 128, 128
      %32 = vsyncadd [#allocation6], %s31
      %s33 = sshll.u32 [#allocation5], 4
      %s34 = int_to_ptr.vmem [resolvable:$true] %s33
      %39 = dma.hbm_to_vmem [thread:$0]  %s1, 128, %s34, [#allocation6], 32, 32, 2
    $region9: #{tpu_custom_call.1} parent=1 // pred_fallthru
      _
    // Predicated region
    $region10: #{tpu_custom_call.1} parent=1 // pred_check
      _
    $region11: #{tpu_custom_call.1} parent=1 // pred_check_branch
      %41 = sbr.rel (0) target = $region13
    $region12: #{tpu_custom_call.1} parent=1 // pred_region
      %s43 = ssub.s32 512, 512
      %44 = vsyncadd [#allocation6], %s43
      %s45 = sshll.u32 [#allocation7], 4
      %s46 = int_to_ptr.vmem [resolvable:$true] %s45
      %51 = dma.hbm_to_vmem [thread:$0]  %s2, 512, %s46, [#allocation6], 128, 128, 8
    $region13: #{tpu_custom_call.1} parent=1 // pred_fallthru
      _
    // Predicated region
    $region14: #{tpu_custom_call.1} parent=1 // pred_check
      _
    $region15: #{tpu_custom_call.1} parent=1 // pred_check_branch
      %53 = sbr.rel (0) target = $region17
    $region16: #{tpu_custom_call.1} parent=1 // pred_region
      _
    $region17: #{tpu_custom_call.1} parent=1 // pred_fallthru
      _
    // Predicated region
    $region18: #{tpu_custom_call.1} parent=1 // pred_check
      _
    $region19: #{tpu_custom_call.1} parent=1 // pred_check_branch
      %55 = sbr.rel (0) target = $region21
    $region20: #{tpu_custom_call.1} parent=1 // pred_region
      %s57 = ssub.s32 512, 512
      %58 = vsyncadd [#allocation9], %s57
      %s59 = sshll.u32 [#allocation8], 4
      %s60 = int_to_ptr.vmem [resolvable:$true] %s59
      %65 = dma.hbm_to_vmem [thread:$0]  %s4, 512, %s60, [#allocation9], 128, 128, 8
    $region21: #{tpu_custom_call.1} parent=1 // pred_fallthru
      _
    // Predicated region
    $region22: #{tpu_custom_call.1} parent=1 // pred_check
      _
    $region23: #{tpu_custom_call.1} parent=1 // pred_check_branch
      %67 = sbr.rel (0) target = $region25
    $region24: #{tpu_custom_call.1} parent=1 // pred_region
      _
    $region25: #{tpu_custom_call.1} parent=1 // pred_fallthru
      _
    // Predicated region
    $region26: #{tpu_custom_call.1} parent=1 // pred_check
      _
    $region27: #{tpu_custom_call.1} parent=1 // pred_check_branch
      %69 = sbr.rel (0) target = $region29
    $region28: #{tpu_custom_call.1} parent=1 // pred_region
      %70 = dma.done [#allocation3], 32
    $region29: #{tpu_custom_call.1} parent=1 // pred_fallthru
      _
    // Predicated region
    $region30: #{tpu_custom_call.1} parent=1 // pred_check
      _
    $region31: #{tpu_custom_call.1} parent=1 // pred_check_branch
      %72 = sbr.rel (0) target = $region33
    $region32: #{tpu_custom_call.1} parent=1 // pred_region
      %73 = dma.done [#allocation6], 128
    $region33: #{tpu_custom_call.1} parent=1 // pred_fallthru
      _
    // Predicated region
    $region34: #{tpu_custom_call.1} parent=1 // pred_check
      _
    $region35: #{tpu_custom_call.1} parent=1 // pred_check_branch
      %75 = sbr.rel (0) target = $region37
    $region36: #{tpu_custom_call.1} parent=1 // pred_region
      %76 = dma.done [#allocation6], 512
    $region37: #{tpu_custom_call.1} parent=1 // pred_fallthru
      _
    // Predicated region
    $region38: #{tpu_custom_call.1} parent=1 // pred_check
      _
    $region39: #{tpu_custom_call.1} parent=1 // pred_check_branch
      %78 = sbr.rel (0) target = $region41
    $region40: #{tpu_custom_call.1} parent=1 // pred_region
      %79 = dma.done [#allocation9], 512
    $region41: #{tpu_custom_call.1} parent=1 // pred_fallthru
      _
    %v80 = vld [vmem:[#allocation5] sm:$0x3]
    %v81 = vld [vmem:[#allocation5 + $0x2] sm:$0x3]
    %v82 = vld [vmem:[#allocation5 + $0x4] sm:$0x3]
    %v83 = vld [vmem:[#allocation5 + $0x6] sm:$0x3]
    %vm84 = vcmask 254976
    %v85 = vsel %vm84, %v80, 0.0
    %v86 = vsel %vm84, %v81, 0.0
    %v87 = vadd.f32 %v85, %v86
    %v88 = vsel %vm84, %v82, 0.0
    %v89 = vadd.f32 %v87, %v88
    %v90 = vsel %vm84, %v83, 0.0
    %v91 = vadd.f32 %v89, %v90
    %v92 = vrcp.pop 4.0
    %v93 = vmul.f32 %v91, %v92
    %v94 = vld [vmem:[#allocation2] sm:$0x3]
    %v95 = vadd.f32 %v93, %v94
    %v96 = vxor.u32 %v95, 2147483648
    %v97 = vmul.f32 %v96, 1.442695
    %v98 = vpow.pop %v97
    %v99 = vadd.f32 %v98, 1.0
    %v100 = vrcp.pop %v99
    %v101 = vmul.f32 1.0, %v100
    %v102 = vmul.f32 %v95, %v101
    %v103 = vld [vmem:[#allocation7] sm:$0xff]
    %v104 = vld [vmem:[#allocation7 + $0x8] sm:$0xff]
    %v105 = vld [vmem:[#allocation7 + $0x10] sm:$0xff]
    %v106 = vld [vmem:[#allocation7 + $0x18] sm:$0xff]
    %v107 = vld [vmem:[#allocation8] sm:$0xff]
    %v108 = vld [vmem:[#allocation8 + $0x8] sm:$0xff]
    %v109 = vld [vmem:[#allocation8 + $0x10] sm:$0xff]
    %v110 = vld [vmem:[#allocation8 + $0x18] sm:$0xff]
    %v111 = vld [vmem:[%s3] sm:$0x1]
    %v113 = vlaneseq
    %v114 = vshrl.u32 %v113, 7
    %v115 = vsub.s32 0, %v114
    %v116 = vrot.slane %v111, %v115
    %vm118 = vcmask 261120
    %v120 = vsel %vm118, %v102, 0
    %122 = vmatprep.subr.mxu0 0.0
    %123 = vmatpush1.msra.mxu0 %v103
    %124 = vmatprep.subr.mxu0 0.0
    %125 = vmatpush1.msra.mxu0 %v104
    %126 = vmatprep.subr.mxu0 0.0
    %127 = vmatpush1.msra.mxu0 %v105
    %128 = vmatprep.subr.mxu0 0.0
    %129 = vmatpush1.msra.mxu0 %v106
    %130 = vmatprep.subr.mxu0 0.0
    %131 = vmatpush1.msra.mxu0 0.0
    %132 = vmatprep.subr.mxu0 0.0
    %133 = vmatpush1.msra.mxu0 0.0
    %134 = vmatprep.subr.mxu0 0.0
    %135 = vmatpush1.msra.mxu0 0.0
    %136 = vmatprep.subr.mxu0 0.0
    %137 = vmatpush1.msra.mxu0 0.0
    %138 = vmatprep.subr.mxu0 0.0
    %139 = vmatpush1.msra.mxu0 0.0
    %140 = vmatprep.subr.mxu0 0.0
    %141 = vmatpush1.msra.mxu0 0.0
    %142 = vmatprep.subr.mxu0 0.0
    %143 = vmatpush1.msra.mxu0 0.0
    %144 = vmatprep.subr.mxu0 0.0
    %145 = vmatpush1.msra.mxu0 0.0
    %146 = vmatprep.subr.mxu0 0.0
    %147 = vmatpush1.msra.mxu0 0.0
    %148 = vmatprep.subr.mxu0 0.0
    %149 = vmatpush1.msra.mxu0 0.0
    %150 = vmatprep.subr.mxu0 0.0
    %151 = vmatpush1.msra.mxu0 0.0
    %152 = vmatprep.subr.mxu0 0.0
    %153 = vmatpush1.msra.mxu0 0.0
    %154 = vmatprep.subr.mxu0 0.0
    %155 = vmatpush1.msra.mxu0 0.0
    %156 = vmatprep.subr.mxu0 0.0
    %157 = vmatpush1.msra.mxu0 0.0
    %158 = vmatprep.subr.mxu0 0.0
    %159 = vmatpush1.msra.mxu0 0.0
    %160 = vmatprep.subr.mxu0 0.0
    %161 = vmatpush1.msra.mxu0 0.0
    %162 = vmatprep.subr.mxu0 0.0
    %163 = vmatpush1.msra.mxu0 0.0
    %164 = vmatprep.subr.mxu0 0.0
    %165 = vmatpush1.msra.mxu0 0.0
    %166 = vmatprep.subr.mxu0 0.0
    %167 = vmatpush1.msra.mxu0 0.0
    %168 = vmatprep.subr.mxu0 0.0
    %169 = vmatpush1.msra.mxu0 0.0
    %170 = vmatprep.subr.mxu0 0.0
    %171 = vmatpush1.msra.mxu0 0.0
    %172 = vmatprep.subr.mxu0 0.0
    %173 = vmatpush1.msra.mxu0 0.0
    %174 = vmatprep.subr.mxu0 0.0
    %175 = vmatpush1.msra.mxu0 0.0
    %176 = vmatprep.subr.mxu0 0.0
    %177 = vmatpush1.msra.mxu0 0.0
    %178 = vmatprep.subr.mxu0 0.0
    %179 = vmatpush1.msra.mxu0 0.0
    %180 = vmatprep.subr.mxu0 0.0
    %181 = vmatpush1.msra.mxu0 0.0
    %182 = vmatprep.subr.mxu0 0.0
    %183 = vmatpush1.msra.mxu0 0.0
    %184 = vmatprep.subr.mxu0 0.0
    %185 = vmatpush1.msra.mxu0 0.0
    %186 = vmatprep.mubr.f32.mxu0 0.0
    %187 = vmatmul.mubr.f32.gmra.mrb[0].mxu0 %v120
    %v188 = vpop.f32.mrb[0].mxu0
    %v189 = vadd.f32 %v116, %v188
    %v190 = vpop.f32.mrb[0].mxu0
    %191 = vdwg.mxu0
    %192 = vst.msk [vmem:[#allocation10] sm:$0x3] %vm84, %v189
    %v193 = vld [vmem:[%s5] sm:$0x1]
    %v195 = vlaneseq
    %v196 = vshrl.u32 %v195, 7
    %v197 = vsub.s32 0, %v196
    %v198 = vrot.slane %v193, %v197
    %200 = vmatprep.subr.mxu0 0.0
    %201 = vmatpush1.msra.mxu0 %v107
    %202 = vmatprep.subr.mxu0 0.0
    %203 = vmatpush1.msra.mxu0 %v108
    %204 = vmatprep.subr.mxu0 0.0
    %205 = vmatpush1.msra.mxu0 %v109
    %206 = vmatprep.subr.mxu0 0.0
    %207 = vmatpush1.msra.mxu0 %v110
    %208 = vmatprep.subr.mxu0 0.0
    %209 = vmatpush1.msra.mxu0 0.0
    %210 = vmatprep.subr.mxu0 0.0
    %211 = vmatpush1.msra.mxu0 0.0
    %212 = vmatprep.subr.mxu0 0.0
    %213 = vmatpush1.msra.mxu0 0.0
    %214 = vmatprep.subr.mxu0 0.0
    %215 = vmatpush1.msra.mxu0 0.0
    %216 = vmatprep.subr.mxu0 0.0
    %217 = vmatpush1.msra.mxu0 0.0
    %218 = vmatprep.subr.mxu0 0.0
    %219 = vmatpush1.msra.mxu0 0.0
    %220 = vmatprep.subr.mxu0 0.0
    %221 = vmatpush1.msra.mxu0 0.0
    %222 = vmatprep.subr.mxu0 0.0
    %223 = vmatpush1.msra.mxu0 0.0
    %224 = vmatprep.subr.mxu0 0.0
    %225 = vmatpush1.msra.mxu0 0.0
    %226 = vmatprep.subr.mxu0 0.0
    %227 = vmatpush1.msra.mxu0 0.0
    %228 = vmatprep.subr.mxu0 0.0
    %229 = vmatpush1.msra.mxu0 0.0
    %230 = vmatprep.subr.mxu0 0.0
    %231 = vmatpush1.msra.mxu0 0.0
    %232 = vmatprep.subr.mxu0 0.0
    %233 = vmatpush1.msra.mxu0 0.0
    %234 = vmatprep.subr.mxu0 0.0
    %235 = vmatpush1.msra.mxu0 0.0
    %236 = vmatprep.subr.mxu0 0.0
    %237 = vmatpush1.msra.mxu0 0.0
    %238 = vmatprep.subr.mxu0 0.0
    %239 = vmatpush1.msra.mxu0 0.0
    %240 = vmatprep.subr.mxu0 0.0
    %241 = vmatpush1.msra.mxu0 0.0
    %242 = vmatprep.subr.mxu0 0.0
    %243 = vmatpush1.msra.mxu0 0.0
    %244 = vmatprep.subr.mxu0 0.0
    %245 = vmatpush1.msra.mxu0 0.0
    %246 = vmatprep.subr.mxu0 0.0
    %247 = vmatpush1.msra.mxu0 0.0
    %248 = vmatprep.subr.mxu0 0.0
    %249 = vmatpush1.msra.mxu0 0.0
    %250 = vmatprep.subr.mxu0 0.0
    %251 = vmatpush1.msra.mxu0 0.0
    %252 = vmatprep.subr.mxu0 0.0
    %253 = vmatpush1.msra.mxu0 0.0
    %254 = vmatprep.subr.mxu0 0.0
    %255 = vmatpush1.msra.mxu0 0.0
    %256 = vmatprep.subr.mxu0 0.0
    %257 = vmatpush1.msra.mxu0 0.0
    %258 = vmatprep.subr.mxu0 0.0
    %259 = vmatpush1.msra.mxu0 0.0
    %260 = vmatprep.subr.mxu0 0.0
    %261 = vmatpush1.msra.mxu0 0.0
    %262 = vmatprep.subr.mxu0 0.0
    %263 = vmatpush1.msra.mxu0 0.0
    %264 = vmatprep.mubr.f32.mxu0 0.0
    %265 = vmatmul.mubr.f32.gmra.mrb[0].mxu0 %v120
    %v266 = vpop.f32.mrb[0].mxu0
    %v267 = vadd.f32 %v198, %v266
    %v268 = vpop.f32.mrb[0].mxu0
    %269 = vdwg.mxu0
    %270 = vst.msk [vmem:[#allocation11] sm:$0x3] %vm84, %v267
    // Predicated region
    $region42: #{tpu_custom_call.1} parent=1 // pred_check
      _
    $region43: #{tpu_custom_call.1} parent=1 // pred_check_branch
      %272 = sbr.rel (0) target = $region45
    $region44: #{tpu_custom_call.1} parent=1 // pred_region
      %s274 = ssub.s32 32, 32
      %275 = vsyncadd [#allocation4], %s274
      %s277 = sshll.u32 [#allocation10], 4
      %s278 = int_to_ptr.vmem [resolvable:$true] %s277
      %280 = dma.vmem_to_hbm [thread:$0]  %s278, 32, %s6, [#allocation4]
    $region45: #{tpu_custom_call.1} parent=1 // pred_fallthru
      _
    // Predicated region
    $region46: #{tpu_custom_call.1} parent=1 // pred_check
      _
    $region47: #{tpu_custom_call.1} parent=1 // pred_check_branch
      %282 = sbr.rel (0) target = $region49
    $region48: #{tpu_custom_call.1} parent=1 // pred_region
      %s284 = ssub.s32 32, 32
      %285 = vsyncadd [#allocation12], %s284
      %s287 = sshll.u32 [#allocation11], 4
      %s288 = int_to_ptr.vmem [resolvable:$true] %s287
      %290 = dma.vmem_to_hbm [thread:$0]  %s288, 32, %s7, [#allocation12]
    $region49: #{tpu_custom_call.1} parent=1 // pred_fallthru
      _
    // Predicated region
    $region50: #{tpu_custom_call.1} parent=1 // pred_check
      _
    $region51: #{tpu_custom_call.1} parent=1 // pred_check_branch
      %292 = sbr.rel (0) target = $region53
    $region52: #{tpu_custom_call.1} parent=1 // pred_region
      %293 = dma.done [#allocation4], 32
    $region53: #{tpu_custom_call.1} parent=1 // pred_fallthru
      _
    // Predicated region
    $region54: #{tpu_custom_call.1} parent=1 // pred_check
      _
    $region55: #{tpu_custom_call.1} parent=1 // pred_check_branch
      %295 = sbr.rel (0) target = $region57
    $region56: #{tpu_custom_call.1} parent=1 // pred_region
      %296 = dma.done [#allocation12], 32
    $region57: #{tpu_custom_call.1} parent=1 // pred_fallthru
      _
    %297 = vsyncpa [#allocation3], 1
    %298 = vsyncpa [#allocation6], 1
    %299 = vsyncpa [#allocation9], 1
    %300 = vsyncpa [#allocation4], 1
    %301 = vsyncpa [#allocation12], 1

</llo_original>
